<compile_context>
chip_gen: v7x
topology: tpu7x:2x2x1
jax: 0.10.0
libtpu: 0.0.40
codegen_flags: <defaults>
</compile_context>

<pallas_src>
import functools
import numpy as np
import jax
import jax.numpy as jnp
from jax import lax
from jax.experimental import pallas as pl
from jax.experimental.pallas import tpu as pltpu


def _round_up(x, m):
    return (x + m - 1) // m * m


def _cdiv(a, b):
    return int(pl.cdiv(int(a), int(b)))


def _sublane_multiple(dtype):
    # 32-bit dtypes tile as (8,128); 16-bit pack 2/sublane -> (16,128); 8-bit -> (32,128).
    itemsize = jnp.dtype(dtype).itemsize
    return max(8, 8 * (4 // max(1, itemsize)))


@functools.lru_cache(maxsize=None)
def _choose_spatial_factorization(hw, sub_mult):
    """Factor HW = S * L so (S, L) forms a dense (sublane, lane) tile.

    Prefers an L that is a multiple of 128 dividing HW (100% lane density);
    otherwise maximizes lane*sublane density, tie-breaking toward larger L
    (chunkier contiguous DMA rows)."""
    best_score, best_l = -1.0, hw
    for l in range(1, hw + 1):
        if hw % l:
            continue
        s = hw // l
        lane_d = l / _round_up(l, 128)
        sub_d = s / _round_up(s, sub_mult)
        score = lane_d * sub_d
        if score > best_score + 1e-12 or (abs(score - best_score) <= 1e-12 and l > best_l):
            best_score, best_l = score, l
    return hw // best_l, best_l


def _vmem_budget_bytes():
    """(block budget, scoped vmem limit) sized per generation."""
    try:
        cap = int(pltpu.get_tpu_info().vmem_capacity_bytes)
    except Exception:
        cap = 64 * 1024 * 1024  # conservative fallback: v7x per-TensorCore physical VMEM
    limit = min(int(cap * 0.75), 96 * 1024 * 1024)   # v5e/v6e ~96MiB, v7x ~48MiB
    budget = int(limit * 0.6)                        # what we size double-buffered blocks to
    return budget, limit


def _expand_kernel(src_ref, x_ref, o_ref):
    # src_ref: SMEM int32[CB*TC]; src[c] = input channel feeding output channel c, -1 => zero.
    # x_ref:   VMEM (tb, C_in, S_blk, L) — full input-channel extent, re-used across channel steps.
    # o_ref:   VMEM (tb, TC,   S_blk, L)
    cb = pl.program_id(2)
    tc = o_ref.shape[1]
    zero_blk = jnp.zeros((o_ref.shape[0], 1, o_ref.shape[2], o_ref.shape[3]), o_ref.dtype)

    def body(j, carry):
        s = src_ref[cb * tc + j]

        @pl.when(s >= 0)
        def _():
            o_ref[:, pl.ds(s, 1) and pl.ds(j, 1), :, :] = (
                x_ref[:, pl.ds(s, 1), :, :].astype(o_ref.dtype))

        @pl.when(s < 0)
        def _():
            o_ref[:, pl.ds(j, 1), :, :] = zero_blk

        return carry

    lax.fori_loop(0, tc, body, 0, unroll=tc <= 8)


# NOTE: the `pl.ds(s, 1) and pl.ds(j, 1)` above would be wrong (Python `and`);
# define the kernel properly here (kept separate so the mistake above is never used).
def _expand_kernel(src_ref, x_ref, o_ref):  # noqa: F811 (intentional redefinition)
    cb = pl.program_id(2)
    tc = o_ref.shape[1]
    zero_blk = jnp.zeros((o_ref.shape[0], 1, o_ref.shape[2], o_ref.shape[3]), o_ref.dtype)

    def body(j, carry):
        s = src_ref[cb * tc + j]

        @pl.when(s >= 0)
        def _():
            o_ref[:, pl.ds(j, 1), :, :] = x_ref[:, pl.ds(s, 1), :, :].astype(o_ref.dtype)

        @pl.when(s < 0)
        def _():
            o_ref[:, pl.ds(j, 1), :, :] = zero_blk

        return carry

    lax.fori_loop(0, tc, body, 0, unroll=tc <= 8)


def channel_expand(x, channel_num, idx, *, out_dtype=None, vmem_budget_bytes=None):
    """Pallas implementation of ChannelExpand.forward.

    x: (N, C_in, H, W); idx: host int array of length C_in giving the output
    channel each input channel lands in. Returns (N, channel_num, H, W).
    out_dtype defaults to x.dtype (pass jnp.float32 to mirror torch.zeros'
    default dtype for non-f32 inputs)."""
    N, C_in, H, W = x.shape
    HW = H * W
    in_dtype = jnp.dtype(x.dtype)
    out_dtype = jnp.dtype(in_dtype if out_dtype is None else out_dtype)

    idx_np = np.asarray(idx).astype(np.int64).reshape(-1)
    if idx_np.shape[0] != C_in:
        raise ValueError(f"len(idx)={idx_np.shape[0]} must equal C_in={C_in}")
    idx_np = np.where(idx_np < 0, idx_np + channel_num, idx_np)

    # ---- Trace-time fast path: module default idx == arange -> pure identity. ----
    if channel_num == C_in and np.array_equal(idx_np, np.arange(channel_num)):
        return x if out_dtype == in_dtype else x.astype(out_dtype)

    # ---- Host-side scatter table (numpy; no jnp scatter / scan per call). ----
    src_np = np.full((channel_num,), -1, dtype=np.int32)
    src_np[idx_np] = np.arange(C_in, dtype=np.int32)

    # ---- Dense spatial factorization HW = S * L. ----
    sub_in = _sublane_multiple(in_dtype)
    sub_out = _sublane_multiple(out_dtype)
    S, L = _choose_spatial_factorization(HW, max(sub_in, sub_out))
    Lp = _round_up(L, 128)
    in_item, out_item = in_dtype.itemsize, out_dtype.itemsize

    def plane_bytes(s_blk, sub, item):
        # Padded VMEM bytes of one (batch-elem, channel) spatial slab.
        return _round_up(s_blk, sub) * Lp * item

    # ---- VMEM-aware tile sizing (padded bytes, double-buffered blocks). ----
    if vmem_budget_bytes is None:
        budget, vmem_limit = _vmem_budget_bytes()
    else:
        budget = int(vmem_budget_bytes)
        vmem_limit = min(max(2 * budget, 16 * 1024 * 1024), 96 * 1024 * 1024)
    budget_x = budget // 2          # input block (full C_in extent), x2 buffers
    budget_o = budget - budget_x    # output block, x2 buffers

    # Spatial tile: full plane unless the per-batch-element input slab is too big.
    S_blk = S
    max_plane_in = max(1, budget_x // (2 * max(C_in, 1)))
    if plane_bytes(S_blk, sub_in, in_item) > max_plane_in and S > sub_in:
        s_try = (max_plane_in // (Lp * in_item)) // sub_in * sub_in
        S_blk = int(max(sub_in, min(S, s_try)))

    # Batch tile from padded input-slab bytes; channel pack (TC) from the remainder.
    tb = int(max(1, min(N, budget_x // (2 * C_in * plane_bytes(S_blk, sub_in, in_item)))))
    TC = int(max(1, min(channel_num,
                        budget_o // (2 * tb * plane_bytes(S_blk, sub_out, out_item)))))

    NB, SB, CB = _cdiv(N, tb), _cdiv(S, S_blk), _cdiv(channel_num, TC)

    # Pad the src table so the last (ragged) channel block reads in-bounds values.
    src_pad = np.full((CB * TC,), -1, dtype=np.int32)
    src_pad[:channel_num] = src_np
    src_tbl = jnp.asarray(src_pad)

    x4 = x.reshape(N, C_in, S, L)  # free view of contiguous NCHW

    bytes_accessed = N * C_in * HW * in_item + N * channel_num * HW * out_item

    out4 = pl.pallas_call(
        _expand_kernel,
        out_shape=jax.ShapeDtypeStruct((N, channel_num, S, L), out_dtype),
        grid_spec=pltpu.PrefetchScalarGridSpec(
            num_scalar_prefetch=1,
            grid=(NB, SB, CB),
            in_specs=[
                # Full input-channel extent per (batch, spatial) tile. Its block
                # index is independent of the channel-block grid axis, so Pallas
                # fetches it once and re-uses it across all CB steps.
                pl.BlockSpec((tb, C_in, S_blk, L),
                             lambda nb, sb, cb, src: (nb, 0, sb, 0)),
            ],
            out_specs=pl.BlockSpec((tb, TC, S_blk, L),
                                   lambda nb, sb, cb, src: (nb, cb, sb, 0)),
        ),
        compiler_params=pltpu.CompilerParams(
            # Disjoint output blocks: batch/spatial axes can shard across v7x's
            # two TensorCores; channel axis stays sequential per core so the
            # resident input block keeps being re-used.
            dimension_semantics=("parallel", "parallel", "arbitrary"),
            vmem_limit_bytes=int(vmem_limit),
        ),
        cost_estimate=pl.CostEstimate(
            flops=0, transcendentals=0, bytes_accessed=int(bytes_accessed)),
    )(src_tbl, x4)

    return out4.reshape(N, channel_num, H, W)


def channel_expand_ref(x, channel_num, idx, out_dtype=None):
    N, C_in, H, W = x.shape
    out_dtype = x.dtype if out_dtype is None else out_dtype
    out = jnp.zeros((N, channel_num, H, W), out_dtype)
    return out.at[:, jnp.asarray(np.asarray(idx))].set(x.astype(out_dtype))


if __name__ == "__main__":
    key = jax.random.PRNGKey(0)
    N, H, W = 2, 16, 16
    channel_num = 4

    # 1) Module default: idx = arange(channel_num) -> identity fast path.
    idx0 = np.arange(channel_num)
    x0 = jax.random.normal(key, (N, channel_num, H, W), dtype=jnp.float32)
    out0 = jax.block_until_ready(channel_expand(x0, channel_num, idx0))
    np.testing.assert_allclose(np.asarray(out0),
                               np.asarray(channel_expand_ref(x0, channel_num, idx0)),
                               rtol=0, atol=0)

    # 2) Channel-pruning case: 3 channels scattered into 6 (runs the kernel).
    idx1 = np.array([0, 2, 5], dtype=np.int32)
    x1 = jax.random.normal(jax.random.PRNGKey(1), (N, 3, H, W), dtype=jnp.float32)
    out1 = jax.block_until_ready(channel_expand(x1, 6, idx1))
    np.testing.assert_allclose(np.asarray(out1),
                               np.asarray(channel_expand_ref(x1, 6, idx1)),
                               rtol=0, atol=0)

    # 3) Spatial plane not a multiple of 128 (7x7) — exercises the factorizer.
    idx2 = np.array([1, 4, 6], dtype=np.int32)
    x2 = jax.random.normal(jax.random.PRNGKey(2), (N, 3, 7, 7), dtype=jnp.float32)
    out2 = jax.block_until_ready(channel_expand(x2, 8, idx2))
    np.testing.assert_allclose(np.asarray(out2),
                               np.asarray(channel_expand_ref(x2, 8, idx2)),
                               rtol=0, atol=0)

    # 4) bf16 input -> bf16 output (dtype follows x; halves HBM store traffic).
    x3 = jax.random.normal(jax.random.PRNGKey(3), (N, 3, H, W)).astype(jnp.bfloat16)
    out3 = jax.block_until_ready(channel_expand(x3, 6, idx1))
    assert out3.dtype == jnp.bfloat16
    np.testing.assert_allclose(
        np.asarray(out3, dtype=np.float32),
        np.asarray(channel_expand_ref(x3, 6, idx1), dtype=np.float32),
        rtol=0, atol=0)

    print("KERNEL_OK")
</pallas_src>

<mosaic_0001>
module attributes {stable_mosaic.version = 11 : i64} {
  func.func @_expand_kernel(%arg0: i32, %arg1: i32, %arg2: i32, %arg3: memref<6xi32, #tpu.memory_space<smem>>, %arg4: memref<2x3x2x128xf32, #tpu.memory_space<vmem>>, %arg5: memref<2x6x2x128xf32, #tpu.memory_space<vmem>>) attributes {dimension_semantics = [#tpu.dimension_semantics<parallel>, #tpu.dimension_semantics<parallel>, #tpu.dimension_semantics<arbitrary>], iteration_bounds = array<i64: 1, 1, 1>, scalar_prefetch = 1 : i64, scratch_operands = 0 : i64, tpu.core_type = #tpu.core_type<tc>, window_params = [{transform_indices = @transform_0, window_bounds = array<i64: 2, 3, 2, 128>}, {transform_indices = @transform_1, window_bounds = array<i64: 2, 6, 2, 128>}]} {
    %cst = arith.constant 0.000000e+00 : f32
    %0 = vector.broadcast %cst : f32 to vector<2x1x2x128xf32>
    %c0_i32 = arith.constant 0 : i32
    %c6_i32 = arith.constant 6 : i32
    %1 = arith.muli %arg2, %c6_i32 : i32
    %2 = arith.addi %1, %c0_i32 : i32
    %3 = arith.index_cast %2 : i32 to index
    %4 = memref.load %arg3[%3] : memref<6xi32, #tpu.memory_space<smem>>
    %c0_i32_0 = arith.constant 0 : i32
    %5 = arith.cmpi sge, %4, %c0_i32_0 : i32
    %6 = arith.extui %5 : i1 to i32
    %c0_i32_1 = arith.constant 0 : i32
    %7 = arith.cmpi ne, %6, %c0_i32_1 : i32
    scf.if %7 {
      %c0 = arith.constant 0 : index
      %61 = arith.index_cast %4 : i32 to index
      %c0_30 = arith.constant 0 : index
      %c0_31 = arith.constant 0 : index
      %62 = vector.load %arg4[%c0, %61, %c0_30, %c0_31] : memref<2x3x2x128xf32, #tpu.memory_space<vmem>>, vector<2x1x2x128xf32>
      %c0_32 = arith.constant 0 : index
      %63 = arith.index_cast %c0_i32 : i32 to index
      %c0_33 = arith.constant 0 : index
      %c0_34 = arith.constant 0 : index
      %64 = vector.load %arg5[%c0_32, %63, %c0_33, %c0_34] : memref<2x6x2x128xf32, #tpu.memory_space<vmem>>, vector<2x1x2x128xf32>
      tpu.vector_store %arg5[%c0_32, %63, %c0_33, %c0_34], %62 {strides = array<i32>} : memref<2x6x2x128xf32, #tpu.memory_space<vmem>>, vector<2x1x2x128xf32>,
    } else {
    }
    %c0_i32_2 = arith.constant 0 : i32
    %8 = arith.cmpi slt, %4, %c0_i32_2 : i32
    %9 = arith.extui %8 : i1 to i32
    %c0_i32_3 = arith.constant 0 : i32
    %10 = arith.cmpi ne, %9, %c0_i32_3 : i32
    scf.if %10 {
      %c0 = arith.constant 0 : index
      %61 = arith.index_cast %c0_i32 : i32 to index
      %c0_30 = arith.constant 0 : index
      %c0_31 = arith.constant 0 : index
      %62 = vector.load %arg5[%c0, %61, %c0_30, %c0_31] : memref<2x6x2x128xf32, #tpu.memory_space<vmem>>, vector<2x1x2x128xf32>
      tpu.vector_store %arg5[%c0, %61, %c0_30, %c0_31], %0 {strides = array<i32>} : memref<2x6x2x128xf32, #tpu.memory_space<vmem>>, vector<2x1x2x128xf32>,
    } else {
    }
    %c1_i32 = arith.constant 1 : i32
    %c6_i32_4 = arith.constant 6 : i32
    %11 = arith.muli %arg2, %c6_i32_4 : i32
    %12 = arith.addi %11, %c1_i32 : i32
    %13 = arith.index_cast %12 : i32 to index
    %14 = memref.load %arg3[%13] : memref<6xi32, #tpu.memory_space<smem>>
    %c0_i32_5 = arith.constant 0 : i32
    %15 = arith.cmpi sge, %14, %c0_i32_5 : i32
    %16 = arith.extui %15 : i1 to i32
    %c0_i32_6 = arith.constant 0 : i32
    %17 = arith.cmpi ne, %16, %c0_i32_6 : i32
    scf.if %17 {
      %c0 = arith.constant 0 : index
      %61 = arith.index_cast %14 : i32 to index
      %c0_30 = arith.constant 0 : index
      %c0_31 = arith.constant 0 : index
      %62 = vector.load %arg4[%c0, %61, %c0_30, %c0_31] : memref<2x3x2x128xf32, #tpu.memory_space<vmem>>, vector<2x1x2x128xf32>
      %c0_32 = arith.constant 0 : index
      %63 = arith.index_cast %c1_i32 : i32 to index
      %c0_33 = arith.constant 0 : index
      %c0_34 = arith.constant 0 : index
      %64 = vector.load %arg5[%c0_32, %63, %c0_33, %c0_34] : memref<2x6x2x128xf32, #tpu.memory_space<vmem>>, vector<2x1x2x128xf32>
      tpu.vector_store %arg5[%c0_32, %63, %c0_33, %c0_34], %62 {strides = array<i32>} : memref<2x6x2x128xf32, #tpu.memory_space<vmem>>, vector<2x1x2x128xf32>,
    } else {
    }
    %c0_i32_7 = arith.constant 0 : i32
    %18 = arith.cmpi slt, %14, %c0_i32_7 : i32
    %19 = arith.extui %18 : i1 to i32
    %c0_i32_8 = arith.constant 0 : i32
    %20 = arith.cmpi ne, %19, %c0_i32_8 : i32
    scf.if %20 {
      %c0 = arith.constant 0 : index
      %61 = arith.index_cast %c1_i32 : i32 to index
      %c0_30 = arith.constant 0 : index
      %c0_31 = arith.constant 0 : index
      %62 = vector.load %arg5[%c0, %61, %c0_30, %c0_31] : memref<2x6x2x128xf32, #tpu.memory_space<vmem>>, vector<2x1x2x128xf32>
      tpu.vector_store %arg5[%c0, %61, %c0_30, %c0_31], %0 {strides = array<i32>} : memref<2x6x2x128xf32, #tpu.memory_space<vmem>>, vector<2x1x2x128xf32>,
    } else {
    }
    %c2_i32 = arith.constant 2 : i32
    %c6_i32_9 = arith.constant 6 : i32
    %21 = arith.muli %arg2, %c6_i32_9 : i32
    %22 = arith.addi %21, %c2_i32 : i32
    %23 = arith.index_cast %22 : i32 to index
    %24 = memref.load %arg3[%23] : memref<6xi32, #tpu.memory_space<smem>>
    %c0_i32_10 = arith.constant 0 : i32
    %25 = arith.cmpi sge, %24, %c0_i32_10 : i32
    %26 = arith.extui %25 : i1 to i32
    %c0_i32_11 = arith.constant 0 : i32
    %27 = arith.cmpi ne, %26, %c0_i32_11 : i32
    scf.if %27 {
      %c0 = arith.constant 0 : index
      %61 = arith.index_cast %24 : i32 to index
      %c0_30 = arith.constant 0 : index
      %c0_31 = arith.constant 0 : index
      %62 = vector.load %arg4[%c0, %61, %c0_30, %c0_31] : memref<2x3x2x128xf32, #tpu.memory_space<vmem>>, vector<2x1x2x128xf32>
      %c0_32 = arith.constant 0 : index
      %63 = arith.index_cast %c2_i32 : i32 to index
      %c0_33 = arith.constant 0 : index
      %c0_34 = arith.constant 0 : index
      %64 = vector.load %arg5[%c0_32, %63, %c0_33, %c0_34] : memref<2x6x2x128xf32, #tpu.memory_space<vmem>>, vector<2x1x2x128xf32>
      tpu.vector_store %arg5[%c0_32, %63, %c0_33, %c0_34], %62 {strides = array<i32>} : memref<2x6x2x128xf32, #tpu.memory_space<vmem>>, vector<2x1x2x128xf32>,
    } else {
    }
    %c0_i32_12 = arith.constant 0 : i32
    %28 = arith.cmpi slt, %24, %c0_i32_12 : i32
    %29 = arith.extui %28 : i1 to i32
    %c0_i32_13 = arith.constant 0 : i32
    %30 = arith.cmpi ne, %29, %c0_i32_13 : i32
    scf.if %30 {
      %c0 = arith.constant 0 : index
      %61 = arith.index_cast %c2_i32 : i32 to index
      %c0_30 = arith.constant 0 : index
      %c0_31 = arith.constant 0 : index
      %62 = vector.load %arg5[%c0, %61, %c0_30, %c0_31] : memref<2x6x2x128xf32, #tpu.memory_space<vmem>>, vector<2x1x2x128xf32>
      tpu.vector_store %arg5[%c0, %61, %c0_30, %c0_31], %0 {strides = array<i32>} : memref<2x6x2x128xf32, #tpu.memory_space<vmem>>, vector<2x1x2x128xf32>,
    } else {
    }
    %c3_i32 = arith.constant 3 : i32
    %c6_i32_14 = arith.constant 6 : i32
    %31 = arith.muli %arg2, %c6_i32_14 : i32
    %32 = arith.addi %31, %c3_i32 : i32
    %33 = arith.index_cast %32 : i32 to index
    %34 = memref.load %arg3[%33] : memref<6xi32, #tpu.memory_space<smem>>
    %c0_i32_15 = arith.constant 0 : i32
    %35 = arith.cmpi sge, %34, %c0_i32_15 : i32
    %36 = arith.extui %35 : i1 to i32
    %c0_i32_16 = arith.constant 0 : i32
    %37 = arith.cmpi ne, %36, %c0_i32_16 : i32
    scf.if %37 {
      %c0 = arith.constant 0 : index
      %61 = arith.index_cast %34 : i32 to index
      %c0_30 = arith.constant 0 : index
      %c0_31 = arith.constant 0 : index
      %62 = vector.load %arg4[%c0, %61, %c0_30, %c0_31] : memref<2x3x2x128xf32, #tpu.memory_space<vmem>>, vector<2x1x2x128xf32>
      %c0_32 = arith.constant 0 : index
      %63 = arith.index_cast %c3_i32 : i32 to index
      %c0_33 = arith.constant 0 : index
      %c0_34 = arith.constant 0 : index
      %64 = vector.load %arg5[%c0_32, %63, %c0_33, %c0_34] : memref<2x6x2x128xf32, #tpu.memory_space<vmem>>, vector<2x1x2x128xf32>
      tpu.vector_store %arg5[%c0_32, %63, %c0_33, %c0_34], %62 {strides = array<i32>} : memref<2x6x2x128xf32, #tpu.memory_space<vmem>>, vector<2x1x2x128xf32>,
    } else {
    }
    %c0_i32_17 = arith.constant 0 : i32
    %38 = arith.cmpi slt, %34, %c0_i32_17 : i32
    %39 = arith.extui %38 : i1 to i32
    %c0_i32_18 = arith.constant 0 : i32
    %40 = arith.cmpi ne, %39, %c0_i32_18 : i32
    scf.if %40 {
      %c0 = arith.constant 0 : index
      %61 = arith.index_cast %c3_i32 : i32 to index
      %c0_30 = arith.constant 0 : index
      %c0_31 = arith.constant 0 : index
      %62 = vector.load %arg5[%c0, %61, %c0_30, %c0_31] : memref<2x6x2x128xf32, #tpu.memory_space<vmem>>, vector<2x1x2x128xf32>
      tpu.vector_store %arg5[%c0, %61, %c0_30, %c0_31], %0 {strides = array<i32>} : memref<2x6x2x128xf32, #tpu.memory_space<vmem>>, vector<2x1x2x128xf32>,
    } else {
    }
    %c4_i32 = arith.constant 4 : i32
    %c6_i32_19 = arith.constant 6 : i32
    %41 = arith.muli %arg2, %c6_i32_19 : i32
    %42 = arith.addi %41, %c4_i32 : i32
    %43 = arith.index_cast %42 : i32 to index
    %44 = memref.load %arg3[%43] : memref<6xi32, #tpu.memory_space<smem>>
    %c0_i32_20 = arith.constant 0 : i32
    %45 = arith.cmpi sge, %44, %c0_i32_20 : i32
    %46 = arith.extui %45 : i1 to i32
    %c0_i32_21 = arith.constant 0 : i32
    %47 = arith.cmpi ne, %46, %c0_i32_21 : i32
    scf.if %47 {
      %c0 = arith.constant 0 : index
      %61 = arith.index_cast %44 : i32 to index
      %c0_30 = arith.constant 0 : index
      %c0_31 = arith.constant 0 : index
      %62 = vector.load %arg4[%c0, %61, %c0_30, %c0_31] : memref<2x3x2x128xf32, #tpu.memory_space<vmem>>, vector<2x1x2x128xf32>
      %c0_32 = arith.constant 0 : index
      %63 = arith.index_cast %c4_i32 : i32 to index
      %c0_33 = arith.constant 0 : index
      %c0_34 = arith.constant 0 : index
      %64 = vector.load %arg5[%c0_32, %63, %c0_33, %c0_34] : memref<2x6x2x128xf32, #tpu.memory_space<vmem>>, vector<2x1x2x128xf32>
      tpu.vector_store %arg5[%c0_32, %63, %c0_33, %c0_34], %62 {strides = array<i32>} : memref<2x6x2x128xf32, #tpu.memory_space<vmem>>, vector<2x1x2x128xf32>,
    } else {
    }
    %c0_i32_22 = arith.constant 0 : i32
    %48 = arith.cmpi slt, %44, %c0_i32_22 : i32
    %49 = arith.extui %48 : i1 to i32
    %c0_i32_23 = arith.constant 0 : i32
    %50 = arith.cmpi ne, %49, %c0_i32_23 : i32
    scf.if %50 {
      %c0 = arith.constant 0 : index
      %61 = arith.index_cast %c4_i32 : i32 to index
      %c0_30 = arith.constant 0 : index
      %c0_31 = arith.constant 0 : index
      %62 = vector.load %arg5[%c0, %61, %c0_30, %c0_31] : memref<2x6x2x128xf32, #tpu.memory_space<vmem>>, vector<2x1x2x128xf32>
      tpu.vector_store %arg5[%c0, %61, %c0_30, %c0_31], %0 {strides = array<i32>} : memref<2x6x2x128xf32, #tpu.memory_space<vmem>>, vector<2x1x2x128xf32>,
    } else {
    }
    %c5_i32 = arith.constant 5 : i32
    %c6_i32_24 = arith.constant 6 : i32
    %51 = arith.muli %arg2, %c6_i32_24 : i32
    %52 = arith.addi %51, %c5_i32 : i32
    %53 = arith.index_cast %52 : i32 to index
    %54 = memref.load %arg3[%53] : memref<6xi32, #tpu.memory_space<smem>>
    %c0_i32_25 = arith.constant 0 : i32
    %55 = arith.cmpi sge, %54, %c0_i32_25 : i32
    %56 = arith.extui %55 : i1 to i32
    %c0_i32_26 = arith.constant 0 : i32
    %57 = arith.cmpi ne, %56, %c0_i32_26 : i32
    scf.if %57 {
      %c0 = arith.constant 0 : index
      %61 = arith.index_cast %54 : i32 to index
      %c0_30 = arith.constant 0 : index
      %c0_31 = arith.constant 0 : index
      %62 = vector.load %arg4[%c0, %61, %c0_30, %c0_31] : memref<2x3x2x128xf32, #tpu.memory_space<vmem>>, vector<2x1x2x128xf32>
      %c0_32 = arith.constant 0 : index
      %63 = arith.index_cast %c5_i32 : i32 to index
      %c0_33 = arith.constant 0 : index
      %c0_34 = arith.constant 0 : index
      %64 = vector.load %arg5[%c0_32, %63, %c0_33, %c0_34] : memref<2x6x2x128xf32, #tpu.memory_space<vmem>>, vector<2x1x2x128xf32>
      tpu.vector_store %arg5[%c0_32, %63, %c0_33, %c0_34], %62 {strides = array<i32>} : memref<2x6x2x128xf32, #tpu.memory_space<vmem>>, vector<2x1x2x128xf32>,
    } else {
    }
    %c0_i32_27 = arith.constant 0 : i32
    %58 = arith.cmpi slt, %54, %c0_i32_27 : i32
    %59 = arith.extui %58 : i1 to i32
    %c0_i32_28 = arith.constant 0 : i32
    %60 = arith.cmpi ne, %59, %c0_i32_28 : i32
    scf.if %60 {
      %c0 = arith.constant 0 : index
      %61 = arith.index_cast %c5_i32 : i32 to index
      %c0_30 = arith.constant 0 : index
      %c0_31 = arith.constant 0 : index
      %62 = vector.load %arg5[%c0, %61, %c0_30, %c0_31] : memref<2x6x2x128xf32, #tpu.memory_space<vmem>>, vector<2x1x2x128xf32>
      tpu.vector_store %arg5[%c0, %61, %c0_30, %c0_31], %0 {strides = array<i32>} : memref<2x6x2x128xf32, #tpu.memory_space<vmem>>, vector<2x1x2x128xf32>,
    } else {
    }
    %c6_i32_29 = arith.constant 6 : i32
    return
  }
  func.func @transform_0(%arg0: i32, %arg1: i32, %arg2: i32, %arg3: memref<6xi32, #tpu.memory_space<smem>>) -> (i32, i32, i32, i32) {
    %c0_i32 = arith.constant 0 : i32
    %c0_i32_0 = arith.constant 0 : i32
    %c0_i32_1 = arith.constant 0 : i32
    return %arg0, %c0_i32, %arg1, %c0_i32_0 : i32, i32, i32, i32
  }
  func.func @transform_1(%arg0: i32, %arg1: i32, %arg2: i32, %arg3: memref<6xi32, #tpu.memory_space<smem>>) -> (i32, i32, i32, i32) {
    %c0_i32 = arith.constant 0 : i32
    %c0_i32_0 = arith.constant 0 : i32
    return %arg0, %arg2, %arg1, %c0_i32 : i32, i32, i32, i32
  }
}

</mosaic_0001>

<llo_original>
// kernel: tpu_custom_call.1
$region0: #{tpu_custom_call.1}
  #allocation0 [shape = 'u32[]', space=smem, size = 0x4, offset = 0x4, fixed_abs, tag = 'smem constant byte address 0x4 - core index']
  #allocation1 [shape = 'u32[144,128]{1,0:T(1,128)}', space=vmem, size = 0x12000, scoped, tag = 'internal scratch']
  #allocation2 [shape = 's32[1]{0}', space=sflag, size = 0x4, scoped, tag = 'scoped memory for tpu_custom_call.1']
  #allocation3 [shape = 'u8[512]{0}', space=smem, size = 0x200, scoped, tag = 'prefetched SMEM operand 0']
  %s0 = inlined_call_operand.hbm [shape: s32[6], index: 0, kind: input, shape index: {}]
  %s1 = inlined_call_operand.hbm [shape: f32[2,3,2,128], index: 1, kind: input, shape index: {}]
  %s2 = inlined_call_operand.hbm [shape: f32[2,6,2,128], index: 2, kind: output, shape index: {}]
  %s3 = sld [smem:[#allocation0]]
  $region66: #{tpu_custom_call.1} parent=0
    _
  %s5 = ssub.s32 1, %s3
  %s6 = scalar_select 0, %s5, %s3
  %8 = dma.hbm_to_smem %s0, 16, [#allocation3], [#allocation2]
  %9 = dma.done [#allocation2], 16
  %10 = sfence
  $region1: #{tpu_custom_call.1} parent=0
    #allocation4 [shape = 'u8[6144]{0}', space=vmem, size = 0x1800, scoped, tag = 'input window, operand 1, single buffered']
    #allocation5 [shape = 's32[1]{0}', space=sflag, size = 0x4, scoped, tag = 'scoped memory for tpu_custom_call.1']
    #allocation6 [shape = 's32[1]{0}', space=sflag, size = 0x4, scoped, tag = 'scoped memory for tpu_custom_call.1']
    #allocation7 [shape = 'u8[12288]{0}', space=vmem, size = 0x3000, scoped, tag = 'output window, operand 0, single buffered']
    %11 = vsyncpa [#allocation5], 0
    %12 = vsyncpa [#allocation6], 0
    // Predicated region
    $region2: #{tpu_custom_call.1} parent=1 // pred_check
      _
    $region3: #{tpu_custom_call.1} parent=1 // pred_check_branch
      %14 = sbr.rel (0) target = $region5
    $region4: #{tpu_custom_call.1} parent=1 // pred_region
      %s16 = ssub.s32 192, 192
      %17 = vsyncadd [#allocation5], %s16
      %s18 = sshll.u32 [#allocation4], 4
      %s19 = int_to_ptr.vmem [resolvable:$true] %s18
      %24 = dma.hbm_to_vmem [thread:$0]  %s1, 192, %s19, [#allocation5], 32, 32, 2
    $region5: #{tpu_custom_call.1} parent=1 // pred_fallthru
      _
    // Predicated region
    $region6: #{tpu_custom_call.1} parent=1 // pred_check
      _
    $region7: #{tpu_custom_call.1} parent=1 // pred_check_branch
      %26 = sbr.rel (0) target = $region9
    $region8: #{tpu_custom_call.1} parent=1 // pred_region
      %27 = dma.done [#allocation5], 192
    $region9: #{tpu_custom_call.1} parent=1 // pred_fallthru
      _
    %s28 = smul.u32 0, 6
    %s29 = sld [smem:[#allocation3 + %s28]]
    %p30 = scmp.ge.s32.totalorder %s29, 0
    // Predicated region
    $region10: #{tpu_custom_call.1} parent=1 // pred_check
      %p31 = pneg %p30
    $region11: #{tpu_custom_call.1} parent=1 // pred_check_branch
      %33 = sbr.rel (%p31) target = $region13
    $region12: #{tpu_custom_call.1} parent=1 // pred_region
      %s34 = smul.u32 %s29, 2
      %s35 = scalar_lea.vmem [#allocation4], %s34
      %v36 = vld [vmem:[%s35] sm:$0x3]
      %v37 = vld [vmem:[%s35 + $0x6] sm:$0x3]
      %38 = vst [vmem:[#allocation7] sm:$0x3] %v36
      %39 = vst [vmem:[#allocation7 + $0xc] sm:$0x3] %v37
    $region13: #{tpu_custom_call.1} parent=1 // pred_fallthru
      _
    %p40 = scmp.lt.s32.totalorder %s29, 0
    // Predicated region
    $region14: #{tpu_custom_call.1} parent=1 // pred_check
      %p41 = pneg %p40
    $region15: #{tpu_custom_call.1} parent=1 // pred_check_branch
      %43 = sbr.rel (%p41) target = $region17
    $region16: #{tpu_custom_call.1} parent=1 // pred_region
      %44 = vst [vmem:[#allocation7] sm:$0x3] 0.0
      %45 = vst [vmem:[#allocation7 + $0xc] sm:$0x3] 0.0
    $region17: #{tpu_custom_call.1} parent=1 // pred_fallthru
      _
    %s46 = sadd.s32 %s28, 1
    %s47 = sld [smem:[#allocation3 + %s46]]
    %p48 = scmp.ge.s32.totalorder %s47, 0
    // Predicated region
    $region18: #{tpu_custom_call.1} parent=1 // pred_check
      %p49 = pneg %p48
    $region19: #{tpu_custom_call.1} parent=1 // pred_check_branch
      %51 = sbr.rel (%p49) target = $region21
    $region20: #{tpu_custom_call.1} parent=1 // pred_region
      %s52 = smul.u32 %s47, 2
      %s53 = scalar_lea.vmem [#allocation4], %s52
      %v54 = vld [vmem:[%s53] sm:$0x3]
      %v55 = vld [vmem:[%s53 + $0x6] sm:$0x3]
      %s56 = scalar_lea.vmem [#allocation7], 2
      %57 = vst [vmem:[%s56] sm:$0x3] %v54
      %58 = vst [vmem:[%s56 + $0xc] sm:$0x3] %v55
    $region21: #{tpu_custom_call.1} parent=1 // pred_fallthru
      _
    %p59 = scmp.lt.s32.totalorder %s47, 0
    // Predicated region
    $region22: #{tpu_custom_call.1} parent=1 // pred_check
      %p60 = pneg %p59
    $region23: #{tpu_custom_call.1} parent=1 // pred_check_branch
      %62 = sbr.rel (%p60) target = $region25
    $region24: #{tpu_custom_call.1} parent=1 // pred_region
      %s63 = scalar_lea.vmem [#allocation7], 2
      %64 = vst [vmem:[%s63] sm:$0x3] 0.0
      %65 = vst [vmem:[%s63 + $0xc] sm:$0x3] 0.0
    $region25: #{tpu_custom_call.1} parent=1 // pred_fallthru
      _
    %s66 = sadd.s32 %s28, 2
    %s67 = sld [smem:[#allocation3 + %s66]]
    %p68 = scmp.ge.s32.totalorder %s67, 0
    // Predicated region
    $region26: #{tpu_custom_call.1} parent=1 // pred_check
      %p69 = pneg %p68
    $region27: #{tpu_custom_call.1} parent=1 // pred_check_branch
      %71 = sbr.rel (%p69) target = $region29
    $region28: #{tpu_custom_call.1} parent=1 // pred_region
      %s72 = smul.u32 %s67, 2
      %s73 = scalar_lea.vmem [#allocation4], %s72
      %v74 = vld [vmem:[%s73] sm:$0x3]
      %v75 = vld [vmem:[%s73 + $0x6] sm:$0x3]
      %s76 = scalar_lea.vmem [#allocation7], 4
      %77 = vst [vmem:[%s76] sm:$0x3] %v74
      %78 = vst [vmem:[%s76 + $0xc] sm:$0x3] %v75
    $region29: #{tpu_custom_call.1} parent=1 // pred_fallthru
      _
    %p79 = scmp.lt.s32.totalorder %s67, 0
    // Predicated region
    $region30: #{tpu_custom_call.1} parent=1 // pred_check
      %p80 = pneg %p79
    $region31: #{tpu_custom_call.1} parent=1 // pred_check_branch
      %82 = sbr.rel (%p80) target = $region33
    $region32: #{tpu_custom_call.1} parent=1 // pred_region
      %s83 = scalar_lea.vmem [#allocation7], 4
      %84 = vst [vmem:[%s83] sm:$0x3] 0.0
      %85 = vst [vmem:[%s83 + $0xc] sm:$0x3] 0.0
    $region33: #{tpu_custom_call.1} parent=1 // pred_fallthru
      _
    %s86 = sadd.s32 %s28, 3
    %s87 = sld [smem:[#allocation3 + %s86]]
    %p88 = scmp.ge.s32.totalorder %s87, 0
    // Predicated region
    $region34: #{tpu_custom_call.1} parent=1 // pred_check
      %p89 = pneg %p88
    $region35: #{tpu_custom_call.1} parent=1 // pred_check_branch
      %91 = sbr.rel (%p89) target = $region37
    $region36: #{tpu_custom_call.1} parent=1 // pred_region
      %s92 = smul.u32 %s87, 2
      %s93 = scalar_lea.vmem [#allocation4], %s92
      %v94 = vld [vmem:[%s93] sm:$0x3]
      %v95 = vld [vmem:[%s93 + $0x6] sm:$0x3]
      %s96 = scalar_lea.vmem [#allocation7], 6
      %97 = vst [vmem:[%s96] sm:$0x3] %v94
      %98 = vst [vmem:[%s96 + $0xc] sm:$0x3] %v95
    $region37: #{tpu_custom_call.1} parent=1 // pred_fallthru
      _
    %p99 = scmp.lt.s32.totalorder %s87, 0
    // Predicated region
    $region38: #{tpu_custom_call.1} parent=1 // pred_check
      %p100 = pneg %p99
    $region39: #{tpu_custom_call.1} parent=1 // pred_check_branch
      %102 = sbr.rel (%p100) target = $region41
    $region40: #{tpu_custom_call.1} parent=1 // pred_region
      %s103 = scalar_lea.vmem [#allocation7], 6
      %104 = vst [vmem:[%s103] sm:$0x3] 0.0
      %105 = vst [vmem:[%s103 + $0xc] sm:$0x3] 0.0
    $region41: #{tpu_custom_call.1} parent=1 // pred_fallthru
      _
    %s106 = sadd.s32 %s28, 4
    %s107 = sld [smem:[#allocation3 + %s106]]
    %p108 = scmp.ge.s32.totalorder %s107, 0
    // Predicated region
    $region42: #{tpu_custom_call.1} parent=1 // pred_check
      %p109 = pneg %p108
    $region43: #{tpu_custom_call.1} parent=1 // pred_check_branch
      %111 = sbr.rel (%p109) target = $region45
    $region44: #{tpu_custom_call.1} parent=1 // pred_region
      %s112 = smul.u32 %s107, 2
      %s113 = scalar_lea.vmem [#allocation4], %s112
      %v114 = vld [vmem:[%s113] sm:$0x3]
      %v115 = vld [vmem:[%s113 + $0x6] sm:$0x3]
      %s116 = scalar_lea.vmem [#allocation7], 8
      %117 = vst [vmem:[%s116] sm:$0x3] %v114
      %118 = vst [vmem:[%s116 + $0xc] sm:$0x3] %v115
    $region45: #{tpu_custom_call.1} parent=1 // pred_fallthru
      _
    %p119 = scmp.lt.s32.totalorder %s107, 0
    // Predicated region
    $region46: #{tpu_custom_call.1} parent=1 // pred_check
      %p120 = pneg %p119
    $region47: #{tpu_custom_call.1} parent=1 // pred_check_branch
      %122 = sbr.rel (%p120) target = $region49
    $region48: #{tpu_custom_call.1} parent=1 // pred_region
      %s123 = scalar_lea.vmem [#allocation7], 8
      %124 = vst [vmem:[%s123] sm:$0x3] 0.0
      %125 = vst [vmem:[%s123 + $0xc] sm:$0x3] 0.0
    $region49: #{tpu_custom_call.1} parent=1 // pred_fallthru
      _
    %s126 = sadd.s32 %s28, 5
    %s127 = sld [smem:[#allocation3 + %s126]]
    %p128 = scmp.ge.s32.totalorder %s127, 0
    // Predicated region
    $region50: #{tpu_custom_call.1} parent=1 // pred_check
      %p129 = pneg %p128
    $region51: #{tpu_custom_call.1} parent=1 // pred_check_branch
      %131 = sbr.rel (%p129) target = $region53
    $region52: #{tpu_custom_call.1} parent=1 // pred_region
      %s132 = smul.u32 %s127, 2
      %s133 = scalar_lea.vmem [#allocation4], %s132
      %v134 = vld [vmem:[%s133] sm:$0x3]
      %v135 = vld [vmem:[%s133 + $0x6] sm:$0x3]
      %s136 = scalar_lea.vmem [#allocation7], 10
      %137 = vst [vmem:[%s136] sm:$0x3] %v134
      %138 = vst [vmem:[%s136 + $0xc] sm:$0x3] %v135
    $region53: #{tpu_custom_call.1} parent=1 // pred_fallthru
      _
    %p139 = scmp.lt.s32.totalorder %s127, 0
    // Predicated region
    $region54: #{tpu_custom_call.1} parent=1 // pred_check
      %p140 = pneg %p139
    $region55: #{tpu_custom_call.1} parent=1 // pred_check_branch
      %142 = sbr.rel (%p140) target = $region57
    $region56: #{tpu_custom_call.1} parent=1 // pred_region
      %s143 = scalar_lea.vmem [#allocation7], 10
      %144 = vst [vmem:[%s143] sm:$0x3] 0.0
      %145 = vst [vmem:[%s143 + $0xc] sm:$0x3] 0.0
    $region57: #{tpu_custom_call.1} parent=1 // pred_fallthru
      _
    // Predicated region
    $region58: #{tpu_custom_call.1} parent=1 // pred_check
      _
    $region59: #{tpu_custom_call.1} parent=1 // pred_check_branch
      %147 = sbr.rel (0) target = $region61
    $region60: #{tpu_custom_call.1} parent=1 // pred_region
      %s149 = ssub.s32 384, 384
      %150 = vsyncadd [#allocation6], %s149
      %s151 = sshll.u32 [#allocation7], 4
      %s152 = int_to_ptr.vmem [resolvable:$true] %s151
      %157 = dma.vmem_to_hbm [thread:$0]  %s152, 384, %s2, [#allocation6], 32, 32, 2
    $region61: #{tpu_custom_call.1} parent=1 // pred_fallthru
      _
    // Predicated region
    $region62: #{tpu_custom_call.1} parent=1 // pred_check
      _
    $region63: #{tpu_custom_call.1} parent=1 // pred_check_branch
      %159 = sbr.rel (0) target = $region65
    $region64: #{tpu_custom_call.1} parent=1 // pred_region
      %160 = dma.done [#allocation6], 384
    $region65: #{tpu_custom_call.1} parent=1 // pred_fallthru
      _
    %161 = vsyncpa [#allocation5], 1
    %162 = vsyncpa [#allocation6], 1

</llo_original>
